<compile_context>
chip_gen: v5e
topology: v5e:2x2
jax: 0.10.0
libtpu: 0.0.40
codegen_flags: <defaults>
</compile_context>

<pallas_src>
import jax
import jax.numpy as jnp
from jax.experimental import pallas as pl
from jax.experimental.pallas import tpu as pltpu


def _round_up(a: int, b: int) -> int:
    return ((a + b - 1) // b) * b


def _vmem_budget():
    """(working budget, scoped vmem_limit_bytes) derived from physical VMEM."""
    try:
        phys = int(pltpu.get_tpu_info().vmem_capacity_bytes)
    except Exception:
        phys = 64 << 20            # v7x per-core size; conservative for v5e/v6e
    budget = max(phys - (20 << 20), 8 << 20)   # ~44 MiB v7x, ~108 MiB v5e/v6e
    limit = max(phys - (16 << 20), budget)     # ~48 MiB v7x, ~112 MiB v5e/v6e
    return budget, limit


def _pick_tiles(K, O, M, in_b, out_b, tm_max, tk_max, budget):
    """Pick (tk, tm): tk divides K (multiple of 128 when < K), tm is the lane tile."""

    def need(tk, tm):
        # Counts the DOUBLE-buffered x/weight/bias/out blocks (review: the
        # weight's second pipeline buffer must be accounted for) + acc scratch
        # + Mosaic internal scratch headroom.
        return (2 * tk * tm * in_b        # x block
                + 2 * O * tk * in_b       # weight block
                + 2 * O * 4               # bias
                + 2 * O * tm * out_b      # out block
                + O * tm * 4              # f32 accumulator scratch
                + (2 << 20))              # internal scratch headroom

    # Partial K blocks would feed garbage into the contraction, so tk must
    # divide K exactly; any tk < K must be a multiple of 128 (weight lane dim).
    cands = [K]
    if K % 128 == 0:
        cands += [t for t in range(K - 128, 0, -128) if K % t == 0]
    if tk_max is not None:
        capped = [t for t in cands if t <= tk_max]
        if capped:
            cands = capped

    if M <= 128:
        m_cap = M                           # one block; full-dim lane spec
    else:
        m_cap = (M // 128) * 128            # 128-aligned; trailing block clipped

    def initial_tm(tk):
        if M <= 128:
            return M
        # Grow toward >= ~1 MiB of x block (and >= 512 lanes) to stay off the
        # per-grid-step overhead floor, capped by tm_max and the pixel count.
        want = max(512, -(-(1 << 20) // max(tk * in_b, 1)))
        return min(tm_max, m_cap, _round_up(want, 128))

    best = None                             # (fits, tm, tk)
    for tk in cands:                        # largest tk first
        tm = initial_tm(tk)
        while tm > 128 and need(tk, tm) > budget:
            tm -= 128
        fits = need(tk, tm) <= budget
        cand = (fits, tm, tk)
        if best is None or cand[:2] > best[:2]:
            best = cand
        if fits and (tm >= 512 or tm >= M):
            best = cand                     # largest tk with a healthy lane tile
            break
    return best[2], best[1]


def _conv1x1_t_kernel(x_ref, w_ref, b_ref, o_ref, acc_ref):
    """One (tk, tm) step of  out^T = W @ X + b  with f32 accumulation over K tiles.

    x_ref: (1, tk, tm)   w_ref: (O, tk)   b_ref: (O, 1) f32
    o_ref: (1, O, tm)    acc_ref: (O, tm) f32 scratch
    """
    k = pl.program_id(2)

    @pl.when(k == 0)
    def _():
        acc_ref[...] = jnp.zeros_like(acc_ref)

    acc_ref[...] += jnp.dot(w_ref[...], x_ref[0],
                            preferred_element_type=jnp.float32)

    @pl.when(k == pl.num_programs(2) - 1)
    def _():
        o_ref[0] = (acc_ref[...] + b_ref[...]).astype(o_ref.dtype)


def _conv1x1_t(x_km, w_ok, bias, out_dtype, *, tk, tm, vmem_limit):
    """x_km: (B, K, M), w_ok: (O, K), bias: (O,) -> (B, O, M) = W @ X + b per batch."""
    B, K, M = x_km.shape
    O = w_ok.shape[0]
    assert K % tk == 0
    bias2d = bias.astype(jnp.float32).reshape(O, 1)

    grid = (B, pl.cdiv(M, tm), K // tk)
    return pl.pallas_call(
        _conv1x1_t_kernel,
        out_shape=jax.ShapeDtypeStruct((B, O, M), out_dtype),
        grid_spec=pltpu.PrefetchScalarGridSpec(
            num_scalar_prefetch=0,
            grid=grid,
            in_specs=[
                pl.BlockSpec((1, tk, tm), lambda b, m, k: (b, k, m)),
                # Weight/bias revisit the same block index across (b, m), so
                # Pallas only re-DMAs them when the K-tile changes.  Their
                # default double buffers are counted in _pick_tiles.need().
                pl.BlockSpec((O, tk), lambda b, m, k: (0, k)),
                pl.BlockSpec((O, 1), lambda b, m, k: (0, 0)),
            ],
            out_specs=pl.BlockSpec((1, O, tm), lambda b, m, k: (b, 0, m)),
            scratch_shapes=[pltpu.VMEM((O, tm), jnp.float32)],
        ),
        compiler_params=pltpu.CompilerParams(
            dimension_semantics=("parallel", "parallel", "arbitrary"),
            vmem_limit_bytes=int(vmem_limit)),
    )(x_km, w_ok, bias2d)


def space_downsample(x, weight, bias, factor=2, *, tm_max=1024, tk_max=None,
                     compute_dtype=jnp.bfloat16):
    """Forward of SpaceDownsample: pixel-unshuffle(factor) + 1x1 conv.

    x:      (B, C, H, W) NCHW.
    weight: (O, C*factor**2) -- the Conv2d 1x1 weight with its trailing (1, 1)
            dims squeezed.  Its input-channel axis MUST be ordered (c, p, q),
            exactly what 'b c (h p) (w q) -> b (c p q) h w' produces
            (i.e. pass torch_conv.weight[:, :, 0, 0] unchanged).
    bias:   (O,).
    Returns (B, O, H//factor, W//factor) in x.dtype.
    compute_dtype=jnp.float32 gives a full-precision parity path; the default
    bf16 feeds the MXU with f32 accumulation (inference-friendly).
    """
    B, C, H, W = x.shape
    f = int(factor)
    assert H % f == 0 and W % f == 0, "spatial dims must be divisible by factor"
    h, w = H // f, W // f
    K = C * f * f
    O, Kw = weight.shape
    assert Kw == K, f"weight must be (O, C*factor**2) = (*, {K}), got {weight.shape}"
    assert bias.shape == (O,)
    M = h * w
    out_dtype = x.dtype

    in_b = jnp.dtype(compute_dtype).itemsize
    out_b = jnp.dtype(out_dtype).itemsize
    budget, vmem_limit = _vmem_budget()

    # Pixel-unshuffle + compute-dtype cast as ONE fused XLA transpose pass that
    # directly produces the (K, lanes) operand of the transposed GEMM (no pad;
    # the per-batch path also needs no output transpose afterwards).
    # TODO(synk): fuse this pass into the kernel for NCHW input (sublane-strided
    # p slice + lane deinterleave for q); not attempted -- see header comment.
    x_c = x.astype(compute_dtype).reshape(B, C, h, f, w, f)

    # Fold the batch into the lane axis when the per-batch pixel count is too
    # small for a bandwidth-sized lane tile: fewer/larger blocks and better
    # sharding across v7x's two TensorCores.  The extra output un-transpose is
    # factor^2 times smaller than the input traffic.
    fold_b = B > 1 and _round_up(M, 128) < 512
    if fold_b:
        x_km = jnp.transpose(x_c, (1, 3, 5, 0, 2, 4)).reshape(1, K, B * M)
        M_eff = B * M
    else:
        x_km = jnp.transpose(x_c, (0, 1, 3, 5, 2, 4)).reshape(B, K, M)
        M_eff = M

    tk, tm = _pick_tiles(K, O, M_eff, in_b, out_b, tm_max, tk_max, budget)

    out = _conv1x1_t(x_km, weight.astype(compute_dtype), bias, out_dtype,
                     tk=tk, tm=tm, vmem_limit=vmem_limit)

    if fold_b:
        out = out.reshape(O, B, h, w).transpose(1, 0, 2, 3)   # (B, O, h, w)
    else:
        out = out.reshape(B, O, h, w)
    return out


def _reference(x, weight, bias, f):
    B, C, H, W = x.shape
    h, w = H // f, W // f
    x_re = x.reshape(B, C, h, f, w, f).transpose(0, 1, 3, 5, 2, 4).reshape(
        B, C * f * f, h, w)
    return jnp.einsum("ok,bkhw->bohw", weight, x_re) + bias[None, :, None, None]


if __name__ == "__main__":
    root = jax.random.PRNGKey(0)

    # (name, B, C, H, W, factor, compute_dtype, tol, tk_max)
    cases = [
        ("base bf16",     2, 4,  16, 16, 2, jnp.bfloat16, 5e-2, None),
        ("ragged-M bf16", 2, 4,  24, 24, 2, jnp.bfloat16, 5e-2, None),  # clipped last block
        ("factor-4 bf16", 2, 4,  16, 16, 4, jnp.bfloat16, 5e-2, None),
        ("K-tiled f32",   1, 64, 16, 16, 2, jnp.float32,  3e-2, 128),   # K accumulation path
    ]

    for idx, (name, B, C, H, W, f, cd, tol, tk_max) in enumerate(cases):
        kx, kw, kb = jax.random.split(jax.random.fold_in(root, idx), 3)
        x = jax.random.normal(kx, (B, C, H, W), dtype=jnp.float32)
        # Conv2d(in=C*f^2, out=C, kernel_size=1) weight: (C, C*f^2, 1, 1) squeezed.
        weight = jax.random.normal(kw, (C, C * f * f), dtype=jnp.float32) * 0.1
        bias = jax.random.normal(kb, (C,), dtype=jnp.float32) * 0.1

        out = space_downsample(x, weight, bias, factor=f,
                               compute_dtype=cd, tk_max=tk_max)
        out = jax.block_until_ready(out)
        ref = _reference(x, weight, bias, f)

        assert out.shape == (B, C, H // f, W // f), (name, out.shape)
        err = float(jnp.max(jnp.abs(out - ref)))
        assert jnp.allclose(out, ref, atol=tol, rtol=tol), (name, err)

    print("KERNEL_OK")
</pallas_src>

<mosaic_0001>
module attributes {stable_mosaic.version = 11 : i64} {
  func.func @_conv1x1_t_kernel(%arg0: i32, %arg1: i32, %arg2: i32, %arg3: memref<1x16x128xbf16, #tpu.memory_space<vmem>>, %arg4: memref<4x16xbf16, #tpu.memory_space<vmem>>, %arg5: memref<4x1xf32, #tpu.memory_space<vmem>>, %arg6: memref<1x4x128xf32, #tpu.memory_space<vmem>>, %arg7: memref<4x128xf32, #tpu.memory_space<vmem>>) attributes {dimension_semantics = [#tpu.dimension_semantics<parallel>, #tpu.dimension_semantics<parallel>, #tpu.dimension_semantics<arbitrary>], iteration_bounds = array<i64: 1, 1, 1>, scalar_prefetch = 0 : i64, scratch_operands = 1 : i64, tpu.core_type = #tpu.core_type<tc>, window_params = [{transform_indices = @transform_0, window_bounds = array<i64: 1, 16, 128>}, {transform_indices = @transform_1, window_bounds = array<i64: 4, 16>}, {pipeline_mode = #tpu.pipeline_mode<synchronous>, transform_indices = @transform_2, window_bounds = array<i64: 4, 1>}, {transform_indices = @transform_3, window_bounds = array<i64: 1, 4, 128>}]} {
    %c0_i32 = arith.constant 0 : i32
    %0 = arith.cmpi eq, %arg2, %c0_i32 : i32
    %1 = arith.extui %0 : i1 to i32
    %c0_i32_0 = arith.constant 0 : i32
    %2 = arith.cmpi ne, %1, %c0_i32_0 : i32
    scf.if %2 {
      %cst_11 = arith.constant 0.000000e+00 : f32
      %13 = vector.broadcast %cst_11 : f32 to vector<4x128xf32>
      %c0_12 = arith.constant 0 : index
      %c0_13 = arith.constant 0 : index
      %14 = vector.load %arg7[%c0_12, %c0_13] : memref<4x128xf32, #tpu.memory_space<vmem>>, vector<4x128xf32>
      tpu.vector_store %arg7[%c0_12, %c0_13], %13 {strides = array<i32>} : memref<4x128xf32, #tpu.memory_space<vmem>>, vector<4x128xf32>,
    } else {
    }
    %c0 = arith.constant 0 : index
    %c0_1 = arith.constant 0 : index
    %3 = vector.load %arg7[%c0, %c0_1] : memref<4x128xf32, #tpu.memory_space<vmem>>, vector<4x128xf32>
    %c0_2 = arith.constant 0 : index
    %c0_3 = arith.constant 0 : index
    %4 = vector.load %arg4[%c0_2, %c0_3] : memref<4x16xbf16, #tpu.memory_space<vmem>>, vector<4x16xbf16>
    %c0_4 = arith.constant 0 : index
    %c0_5 = arith.constant 0 : index
    %c0_6 = arith.constant 0 : index
    %5 = vector.load %arg3[%c0_4, %c0_5, %c0_6] : memref<1x16x128xbf16, #tpu.memory_space<vmem>>, vector<1x16x128xbf16>
    %6 = vector.shape_cast %5 : vector<1x16x128xbf16> to vector<16x128xbf16>
    %cst = arith.constant dense<0.000000e+00> : vector<4x128xf32>
    %7 = tpu.matmul %4, %6, %cst {dimension_numbers = #tpu.dot_dimension_numbers<[1], [0], [0], [1], [0, 0, 1, 1], [], []>} : vector<4x16xbf16>, vector<16x128xbf16>, vector<4x128xf32> -> vector<4x128xf32>
    %8 = arith.addf %3, %7 : vector<4x128xf32>
    %c0_7 = arith.constant 0 : index
    %c0_8 = arith.constant 0 : index
    %9 = vector.load %arg7[%c0_7, %c0_8] : memref<4x128xf32, #tpu.memory_space<vmem>>, vector<4x128xf32>
    tpu.vector_store %arg7[%c0_7, %c0_8], %8 {strides = array<i32>} : memref<4x128xf32, #tpu.memory_space<vmem>>, vector<4x128xf32>,
    %c0_i32_9 = arith.constant 0 : i32
    %10 = arith.cmpi eq, %arg2, %c0_i32_9 : i32
    %11 = arith.extui %10 : i1 to i32
    %c0_i32_10 = arith.constant 0 : i32
    %12 = arith.cmpi ne, %11, %c0_i32_10 : i32
    scf.if %12 {
      %c0_11 = arith.constant 0 : index
      %c0_12 = arith.constant 0 : index
      %13 = vector.load %arg7[%c0_11, %c0_12] : memref<4x128xf32, #tpu.memory_space<vmem>>, vector<4x128xf32>
      %c0_13 = arith.constant 0 : index
      %c0_14 = arith.constant 0 : index
      %14 = vector.load %arg5[%c0_13, %c0_14] : memref<4x1xf32, #tpu.memory_space<vmem>>, vector<4x1xf32>
      %15 = vector.broadcast %14 : vector<4x1xf32> to vector<4x128xf32>
      %16 = arith.addf %13, %15 : vector<4x128xf32>
      %c0_15 = arith.constant 0 : index
      %c0_16 = arith.constant 0 : index
      %c0_17 = arith.constant 0 : index
      %17 = vector.load %arg6[%c0_15, %c0_16, %c0_17] : memref<1x4x128xf32, #tpu.memory_space<vmem>>, vector<1x4x128xf32>
      %18 = vector.shape_cast %17 : vector<1x4x128xf32> to vector<4x128xf32>
      %19 = vector.shape_cast %16 : vector<4x128xf32> to vector<1x4x128xf32>
      tpu.vector_store %arg6[%c0_15, %c0_16, %c0_17], %19 {strides = array<i32>} : memref<1x4x128xf32, #tpu.memory_space<vmem>>, vector<1x4x128xf32>,
    } else {
    }
    return
  }
  func.func @transform_0(%arg0: i32, %arg1: i32, %arg2: i32) -> (i32, i32, i32) {
    %c0_i32 = arith.constant 0 : i32
    return %arg0, %arg2, %arg1 : i32, i32, i32
  }
  func.func @transform_1(%arg0: i32, %arg1: i32, %arg2: i32) -> (i32, i32) {
    %c0_i32 = arith.constant 0 : i32
    %c0_i32_0 = arith.constant 0 : i32
    return %c0_i32, %arg2 : i32, i32
  }
  func.func @transform_2(%arg0: i32, %arg1: i32, %arg2: i32) -> (i32, i32) {
    %c0_i32 = arith.constant 0 : i32
    %c0_i32_0 = arith.constant 0 : i32
    %c0_i32_1 = arith.constant 0 : i32
    return %c0_i32, %c0_i32_0 : i32, i32
  }
  func.func @transform_3(%arg0: i32, %arg1: i32, %arg2: i32) -> (i32, i32, i32) {
    %c0_i32 = arith.constant 0 : i32
    %c0_i32_0 = arith.constant 0 : i32
    return %arg0, %c0_i32, %arg1 : i32, i32, i32
  }
}

</mosaic_0001>

<llo_original>
// kernel: tpu_custom_call.1
$region0: #{tpu_custom_call.1}
  #allocation0 [shape = 'u32[]', space=smem, size = 0x4, offset = 0x4, fixed_abs, tag = 'smem constant byte address 0x4 - core index']
  #allocation1 [shape = 'u32[72,128]{1,0:T(1,128)}', space=vmem, size = 0x9000, scoped, tag = 'internal scratch']
  #allocation2 [shape = 'f32[4,128]{1,0:T(4,128)}', space=vmem, size = 0x800, scoped, tag = 'scratch operand']
  %s0 = inlined_call_operand.hbm [shape: bf16[1,16,128], index: 0, kind: input, shape index: {}]
  %s1 = inlined_call_operand.vmem [shape: bf16[4,16], index: 1, kind: input, shape index: {}]
  %s2 = inlined_call_operand.vmem [shape: f32[4,1], index: 2, kind: input, shape index: {}]
  %s3 = inlined_call_operand.hbm [shape: f32[1,4,128], index: 3, kind: output, shape index: {}]
  %s4 = sld [smem:[#allocation0]]
  $region34: #{tpu_custom_call.1} parent=0
    _
  %s6 = ssub.s32 1, %s4
  %s7 = scalar_select 0, %s6, %s4
  $region1: #{tpu_custom_call.1} parent=0
    #allocation3 [shape = 'u8[4096]{0}', space=vmem, size = 0x1000, scoped, tag = 'input window, operand 0, single buffered']
    #allocation4 [shape = 's32[1]{0}', space=sflag, size = 0x4, scoped, tag = 'scoped memory for tpu_custom_call.1']
    #allocation5 [shape = 's32[1]{0}', space=sflag, size = 0x4, scoped, tag = 'scoped memory for tpu_custom_call.1']
    #allocation6 [shape = 'u8[2048]{0}', space=vmem, size = 0x800, scoped, tag = 'output window, operand 0, single buffered']
    %8 = vsyncpa [#allocation4], 0
    %9 = vsyncpa [#allocation5], 0
    // Predicated region
    $region2: #{tpu_custom_call.1} parent=1 // pred_check
      _
    $region3: #{tpu_custom_call.1} parent=1 // pred_check_branch
      %11 = sbr.rel (0) target = $region5
    $region4: #{tpu_custom_call.1} parent=1 // pred_region
      %13 = vsyncadd [#allocation4], 0
      %s14 = sshll.u32 %s0, 4
      %s15 = int_to_ptr.hbm [resolvable:$true] %s14
      %s16 = sshll.u32 [#allocation3], 4
      %s17 = int_to_ptr.vmem [resolvable:$true] %s16
      %22 = dma.hbm_to_vmem [thread:$0]  %s15, 128, %s17, [#allocation4], 64, 64, 4
    $region5: #{tpu_custom_call.1} parent=1 // pred_fallthru
      _
    // Predicated region
    $region6: #{tpu_custom_call.1} parent=1 // pred_check
      _
    $region7: #{tpu_custom_call.1} parent=1 // pred_check_branch
      %24 = sbr.rel (0) target = $region9
    $region8: #{tpu_custom_call.1} parent=1 // pred_region
      _
    $region9: #{tpu_custom_call.1} parent=1 // pred_fallthru
      _
    // Predicated region
    $region10: #{tpu_custom_call.1} parent=1 // pred_check
      _
    $region11: #{tpu_custom_call.1} parent=1 // pred_check_branch
      %26 = sbr.rel (0) target = $region13
    $region12: #{tpu_custom_call.1} parent=1 // pred_region
      _
    $region13: #{tpu_custom_call.1} parent=1 // pred_fallthru
      _
    // Predicated region
    $region14: #{tpu_custom_call.1} parent=1 // pred_check
      _
    $region15: #{tpu_custom_call.1} parent=1 // pred_check_branch
      %28 = sbr.rel (0) target = $region17
    $region16: #{tpu_custom_call.1} parent=1 // pred_region
      %30 = dma.done [#allocation4], 128
    $region17: #{tpu_custom_call.1} parent=1 // pred_fallthru
      _
    %p32 = scmp.eq.s32.totalorder 0, 0
    // Predicated region
    $region18: #{tpu_custom_call.1} parent=1 // pred_check
      %p33 = pneg %p32
    $region19: #{tpu_custom_call.1} parent=1 // pred_check_branch
      %35 = sbr.rel (%p33) target = $region21
    $region20: #{tpu_custom_call.1} parent=1 // pred_region
      %36 = vst [vmem:[#allocation2] sm:$0xf] 0.0
    $region21: #{tpu_custom_call.1} parent=1 // pred_fallthru
      _
    %v37 = vld [vmem:[#allocation2] sm:$0xf]
    %v38 = vld [vmem:[%s1] sm:$0x3]
    %v39 = vld [vmem:[#allocation3] sm:$0xf]
    %v40 = vld [vmem:[#allocation3 + $0x4] sm:$0xf]
    %v43 = vunpack.c.l.b16 %v39
    %v44 = vunpack.c.l.b16 %v40
    %v45 = vpack.c.b16 %v44, %v43
    %vm47 = vcmask 130048
    %v49 = vsel %vm47, %v38, 0
    %51 = vmatpush.bf16.msra.mxu0 0
    %52 = vmatpush.bf16.msra.mxu0 0
    %53 = vmatpush.bf16.msra.mxu0 0
    %54 = vmatpush.bf16.msra.mxu0 0
    %55 = vmatpush.bf16.msra.mxu0 0
    %56 = vmatpush.bf16.msra.mxu0 0
    %57 = vmatpush.bf16.msra.mxu0 0
    %58 = vmatpush.bf16.msra.mxu0 %v45
    %59 = vmatmul.bf16.gmra.mxu0 %v49
    %v60 = vpop.f32.mrf.mxu0
    %v61 = vadd.f32 0.0, %v60
    %v62 = vpop.f32.mrf.mxu0
    %63 = vdwg.mxu0
    %v64 = vadd.f32 %v37, %v61
    %65 = vst [vmem:[#allocation2] sm:$0xf] %v64
    // Predicated region
    $region22: #{tpu_custom_call.1} parent=1 // pred_check
      %p66 = pneg %p32
    $region23: #{tpu_custom_call.1} parent=1 // pred_check_branch
      %68 = sbr.rel (%p66) target = $region25
    $region24: #{tpu_custom_call.1} parent=1 // pred_region
      %v69 = vld [vmem:[#allocation2] sm:$0xf]
      %v70 = vld [vmem:[%s2] sm:$0xf]
      %72 = vset.pattern.permute.xlu0 0
      %73 = vperm.xlu0 %72, %v70
      %v74 = vpop.permute.xlu0 %73
      %v76 = vadd.f32 %v69, %v74
      %77 = vst [vmem:[#allocation6] sm:$0xf] %v76
    $region25: #{tpu_custom_call.1} parent=1 // pred_fallthru
      _
    // Predicated region
    $region26: #{tpu_custom_call.1} parent=1 // pred_check
      _
    $region27: #{tpu_custom_call.1} parent=1 // pred_check_branch
      %79 = sbr.rel (0) target = $region29
    $region28: #{tpu_custom_call.1} parent=1 // pred_region
      %81 = vsyncadd [#allocation5], 0
      %s83 = sshll.u32 [#allocation6], 4
      %s84 = int_to_ptr.vmem [resolvable:$true] %s83
      %s85 = sshll.u32 %s3, 4
      %s86 = int_to_ptr.hbm [resolvable:$true] %s85
      %88 = dma.vmem_to_hbm [thread:$0]  %s84, 64, %s86, [#allocation5]
    $region29: #{tpu_custom_call.1} parent=1 // pred_fallthru
      _
    // Predicated region
    $region30: #{tpu_custom_call.1} parent=1 // pred_check
      _
    $region31: #{tpu_custom_call.1} parent=1 // pred_check_branch
      %90 = sbr.rel (0) target = $region33
    $region32: #{tpu_custom_call.1} parent=1 // pred_region
      %92 = dma.done [#allocation5], 64
    $region33: #{tpu_custom_call.1} parent=1 // pred_fallthru
      _
    %93 = vsyncpa [#allocation4], 1
    %94 = vsyncpa [#allocation5], 1

</llo_original>
